<compile_context>
chip_gen: v7x
topology: tpu7x:2x2x1
jax: 0.10.0
libtpu: 0.0.40
codegen_flags: <defaults>
</compile_context>

<pallas_src>
import jax
import jax.numpy as jnp
from jax.experimental import pallas as pl
from jax.experimental.pallas import tpu as pltpu

EPS = 1e-6


def fused_sublayer_kernel(x_ref, w_ref, b_ref, o_ref, n_ref):
    """o = x + ((x - mean)/(std+eps)) @ W' + bias'   (LN affine / bias folded into W', bias')."""
    h = x_ref.shape[1]
    tn = o_ref.shape[1]

    # Normalize once per row tile (j == 0), stash in VMEM scratch, reuse for
    # every weight-column tile.  The f32 temporaries die before the matmul.
    @pl.when(pl.program_id(1) == 0)
    def _():
        xf = x_ref[...].astype(jnp.float32)
        mean = jnp.mean(xf, axis=-1, keepdims=True)
        diff = xf - mean
        var = jnp.sum(diff * diff, axis=-1, keepdims=True) / (h - 1)   # torch std: ddof=1
        inv = pl.reciprocal(jnp.sqrt(var) + EPS, approx=True)          # EUP slot
        n_ref[...] = (diff * inv).astype(n_ref.dtype)

    # MXU: bf16 x bf16 -> f32 accumulation.
    s = jnp.dot(n_ref[...], w_ref[...], preferred_element_type=jnp.float32)
    s = s + b_ref[...]                                                 # folded bias (f32)

    # Residual: re-read the x tile (column slice for this j) in the epilogue
    # instead of keeping the f32 up-cast live across the matmul.
    if tn == h:
        x_res = x_ref[...]
    else:
        col0 = pl.multiple_of(pl.program_id(1) * tn, tn)
        x_res = x_ref[:, pl.ds(col0, tn)]

    # TODO(synk): training-mode dropout (PRNG mask + 1/(1-p) scaling) not
    # applied; eval-mode nn.Dropout is the identity, which this matches.
    o_ref[...] = (x_res.astype(jnp.float32) + s).astype(o_ref.dtype)


def _round_up(x, m):
    return (x + m - 1) // m * m


def _tpu_budgets():
    """(row-tile target, vmem_limit_bytes) derived from the actual chip."""
    try:
        cap = pltpu.get_tpu_info().vmem_capacity_bytes
    except Exception:
        cap = 64 * 1024 * 1024            # conservative (v7x-sized) fallback
    vmem_limit = int(cap * 4 // 5)        # headroom for compiler scratch / semaphores
    row_target = 512 if cap >= 96 * 1024 * 1024 else 256   # v5e/v6e: 128 MiB, v7x: 64 MiB
    return row_target, vmem_limit


def _pick_row_tile(rows, target):
    """Sublane/MXU-aligned row tile; >= 2 tiles for v7x megacore; ragged R is padded."""
    if rows <= 8:
        return 8
    if rows < 256:
        return max(8, _round_up((rows + 1) // 2, 8))
    return max(128, min(target, (rows // 2) // 128 * 128))


def _pick_col_tile(h, itemsize, budget_bytes):
    """Weight-column tile.  Full width when the (H,H) block fits the budget or
    when H is not 128-aligned (the LN feature width can't be padded)."""
    if h * h * itemsize <= budget_bytes or h % 128 != 0:
        return h
    tn = max(128, (budget_bytes // (h * itemsize)) // 128 * 128)
    while h % tn:
        tn -= 128
    return tn


def sublayer_connection(x, a2, b2, w, bw, *, matmul_dtype=jnp.bfloat16,
                        tm=None, tn=None):
    """x: (B, S, H).  Returns x + Linear(LayerNorm(x))  (dropout = identity)."""
    B, S, H = x.shape
    R = B * S
    row_target, vmem_limit = _tpu_budgets()

    # Fold LN affine + Linear bias into the weights (in f32), then cast the MXU
    # operand once on the host: all three generations' MXUs are bf16-native.
    a2f = a2.reshape(H).astype(jnp.float32)
    b2f = b2.reshape(H).astype(jnp.float32)
    wf = w.astype(jnp.float32)
    w_folded = (a2f[:, None] * wf).astype(matmul_dtype)                     # (H, H)
    bias_folded = (b2f @ wf + bw.reshape(H).astype(jnp.float32)).reshape(1, H)  # f32

    if tm is None:
        tm = _pick_row_tile(R, row_target)
    if tn is None:
        # /8: W' is double-buffered by the pipeline; leave room for x/out/scratch.
        tn = _pick_col_tile(H, jnp.dtype(matmul_dtype).itemsize, vmem_limit // 8)

    x2 = x.reshape(R, H)
    R_pad = _round_up(R, tm)
    if R_pad != R:
        # Zero rows normalize to zero (diff == 0) and are sliced off below.
        x2 = jnp.pad(x2, ((0, R_pad - R), (0, 0)))

    # TODO(synk): on v7x an fp8 W' would halve resident-weight VMEM again;
    # kept bf16 for accuracy/portability.
    out = pl.pallas_call(
        fused_sublayer_kernel,
        out_shape=jax.ShapeDtypeStruct((R_pad, H), x.dtype),
        grid=(R_pad // tm, H // tn),
        in_specs=[
            pl.BlockSpec((tm, H), lambda i, j: (i, 0)),   # x rows (full feature width for LN)
            pl.BlockSpec((H, tn), lambda i, j: (0, j)),   # W' (bf16, column-tiled)
            pl.BlockSpec((1, tn), lambda i, j: (0, j)),   # folded bias (f32)
        ],
        out_specs=pl.BlockSpec((tm, tn), lambda i, j: (i, j)),
        scratch_shapes=[pltpu.VMEM((tm, H), matmul_dtype)],   # normalized row tile
        # Residual update is naturally in-place.  NOTE: this donates the x2
        # buffer; XLA inserts a copy if the caller still needs x afterwards.
        input_output_aliases={0: 0},
        compiler_params=pltpu.CompilerParams(
            # j must stay un-sharded: the normalized scratch is filled at
            # j == 0 and reused for j > 0.
            dimension_semantics=("parallel", "arbitrary"),
            vmem_limit_bytes=vmem_limit,
        ),
    )(x2, w_folded, bias_folded)

    return out[:R].reshape(B, S, H)


def reference(x, a2, b2, w, bw):
    mean = jnp.mean(x, axis=-1, keepdims=True)
    std = jnp.std(x, axis=-1, keepdims=True, ddof=1)
    normed = a2 * (x - mean) / (std + EPS) + b2
    return x + (normed @ w + bw)          # dropout = identity in eval mode


if __name__ == "__main__":
    key = jax.random.PRNGKey(0)
    B, S, H = 2, 8, 32                    # batch, seq, hidden (size = H)
    kx, kw, kb = jax.random.split(key, 3)

    x = jax.random.normal(kx, (B, S, H), dtype=jnp.float32)

    # LayerNorm params exactly as in __init__: a_2 = ones, b_2 = zeros.
    a2 = jnp.ones((H,), dtype=jnp.float32)
    b2 = jnp.zeros((H,), dtype=jnp.float32)

    # Deterministic sublayer (Linear H -> H) parameters.
    w = jax.random.normal(kw, (H, H), dtype=jnp.float32) * (1.0 / jnp.sqrt(H))
    bw = jax.random.normal(kb, (H,), dtype=jnp.float32) * 0.01

    ref = reference(x, a2, b2, w, bw)     # f32 reference, computed BEFORE the donating call

    out = sublayer_connection(x, a2, b2, w, bw)
    out = jax.block_until_ready(out)

    assert out.shape == (B, S, H)
    # Tolerance covers the bf16 MXU operands (W' and the normalized tile) and
    # the approx (EUP) reciprocal; everything else is f32.
    err = float(jnp.max(jnp.abs(out - ref)))
    assert jnp.allclose(out, ref, atol=3e-2, rtol=3e-2), f"max abs err {err}"

    print("KERNEL_OK")
</pallas_src>

<mosaic_0001>
module attributes {stable_mosaic.version = 11 : i64} {
  func.func @fused_sublayer_kernel(%arg0: i32, %arg1: i32, %arg2: memref<8x32xf32, #tpu.memory_space<vmem>>, %arg3: memref<32x32xbf16, #tpu.memory_space<vmem>>, %arg4: memref<1x32xf32, #tpu.memory_space<vmem>>, %arg5: memref<8x32xf32, #tpu.memory_space<vmem>>, %arg6: memref<8x32xbf16, #tpu.memory_space<vmem>>) attributes {dimension_semantics = [#tpu.dimension_semantics<parallel>, #tpu.dimension_semantics<arbitrary>], iteration_bounds = array<i64: 2, 1>, scalar_prefetch = 0 : i64, scratch_operands = 1 : i64, tpu.core_type = #tpu.core_type<tc>, window_params = [{transform_indices = @transform_0, window_bounds = array<i64: 8, 32>}, {transform_indices = @transform_1, window_bounds = array<i64: 32, 32>}, {transform_indices = @transform_2, window_bounds = array<i64: 1, 32>}, {transform_indices = @transform_3, window_bounds = array<i64: 8, 32>}]} {
    %c0_i32 = arith.constant 0 : i32
    %0 = arith.cmpi eq, %arg1, %c0_i32 : i32
    %1 = arith.extui %0 : i1 to i32
    %c0_i32_0 = arith.constant 0 : i32
    %2 = arith.cmpi ne, %1, %c0_i32_0 : i32
    scf.if %2 {
      %c0_10 = arith.constant 0 : index
      %c0_11 = arith.constant 0 : index
      %12 = vector.load %arg2[%c0_10, %c0_11] : memref<8x32xf32, #tpu.memory_space<vmem>>, vector<8x32xf32>
      %cst_12 = arith.constant dense<0.000000e+00> : vector<8xf32>
      %13 = vector.multi_reduction <add>, %12, %cst_12 [1] : vector<8x32xf32> to vector<8xf32>
      %14 = vector.shape_cast %13 : vector<8xf32> to vector<8x1xf32>
      %cst_13 = arith.constant 3.200000e+01 : f32
      %15 = vector.broadcast %cst_13 : f32 to vector<8x1xf32>
      %16 = arith.divf %14, %15 : vector<8x1xf32>
      %17 = vector.broadcast %16 : vector<8x1xf32> to vector<8x32xf32>
      %18 = arith.subf %12, %17 : vector<8x32xf32>
      %19 = arith.mulf %18, %18 : vector<8x32xf32>
      %cst_14 = arith.constant dense<0.000000e+00> : vector<8xf32>
      %20 = vector.multi_reduction <add>, %19, %cst_14 [1] : vector<8x32xf32> to vector<8xf32>
      %21 = vector.shape_cast %20 : vector<8xf32> to vector<8x1xf32>
      %cst_15 = arith.constant 3.100000e+01 : f32
      %22 = vector.broadcast %cst_15 : f32 to vector<8x1xf32>
      %23 = arith.divf %21, %22 : vector<8x1xf32>
      %24 = math.sqrt %23 : vector<8x1xf32>
      %cst_16 = arith.constant 9.99999997E-7 : f32
      %25 = vector.broadcast %cst_16 : f32 to vector<8x1xf32>
      %26 = arith.addf %24, %25 : vector<8x1xf32>
      %27 = tpu.reciprocal %26 {approx = true} : vector<8x1xf32> -> vector<8x1xf32>
      %28 = vector.broadcast %27 : vector<8x1xf32> to vector<8x32xf32>
      %29 = arith.mulf %18, %28 : vector<8x32xf32>
      %30 = arith.truncf %29 : vector<8x32xf32> to vector<8x32xbf16>
      %c0_17 = arith.constant 0 : index
      %c0_18 = arith.constant 0 : index
      %31 = vector.load %arg6[%c0_17, %c0_18] : memref<8x32xbf16, #tpu.memory_space<vmem>>, vector<8x32xbf16>
      tpu.vector_store %arg6[%c0_17, %c0_18], %30 {strides = array<i32>} : memref<8x32xbf16, #tpu.memory_space<vmem>>, vector<8x32xbf16>,
    } else {
    }
    %c0 = arith.constant 0 : index
    %c0_1 = arith.constant 0 : index
    %3 = vector.load %arg6[%c0, %c0_1] : memref<8x32xbf16, #tpu.memory_space<vmem>>, vector<8x32xbf16>
    %c0_2 = arith.constant 0 : index
    %c0_3 = arith.constant 0 : index
    %4 = vector.load %arg3[%c0_2, %c0_3] : memref<32x32xbf16, #tpu.memory_space<vmem>>, vector<32x32xbf16>
    %cst = arith.constant dense<0.000000e+00> : vector<8x32xf32>
    %5 = tpu.matmul %3, %4, %cst {dimension_numbers = #tpu.dot_dimension_numbers<[1], [0], [0], [1], [0, 0, 1, 1], [], []>} : vector<8x32xbf16>, vector<32x32xbf16>, vector<8x32xf32> -> vector<8x32xf32>
    %c0_4 = arith.constant 0 : index
    %c0_5 = arith.constant 0 : index
    %6 = vector.load %arg4[%c0_4, %c0_5] : memref<1x32xf32, #tpu.memory_space<vmem>>, vector<1x32xf32>
    %7 = vector.broadcast %6 : vector<1x32xf32> to vector<8x32xf32>
    %8 = arith.addf %5, %7 : vector<8x32xf32>
    %c0_6 = arith.constant 0 : index
    %c0_7 = arith.constant 0 : index
    %9 = vector.load %arg2[%c0_6, %c0_7] : memref<8x32xf32, #tpu.memory_space<vmem>>, vector<8x32xf32>
    %10 = arith.addf %9, %8 : vector<8x32xf32>
    %c0_8 = arith.constant 0 : index
    %c0_9 = arith.constant 0 : index
    %11 = vector.load %arg5[%c0_8, %c0_9] : memref<8x32xf32, #tpu.memory_space<vmem>>, vector<8x32xf32>
    tpu.vector_store %arg5[%c0_8, %c0_9], %10 {strides = array<i32>} : memref<8x32xf32, #tpu.memory_space<vmem>>, vector<8x32xf32>,
    return
  }
  func.func @transform_0(%arg0: i32, %arg1: i32) -> (i32, i32) {
    %c0_i32 = arith.constant 0 : i32
    %c0_i32_0 = arith.constant 0 : i32
    return %arg0, %c0_i32 : i32, i32
  }
  func.func @transform_1(%arg0: i32, %arg1: i32) -> (i32, i32) {
    %c0_i32 = arith.constant 0 : i32
    %c0_i32_0 = arith.constant 0 : i32
    return %c0_i32, %arg1 : i32, i32
  }
  func.func @transform_2(%arg0: i32, %arg1: i32) -> (i32, i32) {
    %c0_i32 = arith.constant 0 : i32
    %c0_i32_0 = arith.constant 0 : i32
    return %c0_i32, %arg1 : i32, i32
  }
  func.func @transform_3(%arg0: i32, %arg1: i32) -> (i32, i32) {
    %c0_i32 = arith.constant 0 : i32
    return %arg0, %arg1 : i32, i32
  }
}

</mosaic_0001>

<llo_original>
// kernel: tpu_custom_call.1
$region0: #{tpu_custom_call.1}
  #allocation0 [shape = 'u32[]', space=smem, size = 0x4, offset = 0x4, fixed_abs, tag = 'smem constant byte address 0x4 - core index']
  #allocation1 [shape = 'u32[144,128]{1,0:T(1,128)}', space=vmem, size = 0x12000, scoped, tag = 'internal scratch']
  #allocation2 [shape = 'bf16[8,32]{1,0:T(8,128)(2,1)}', space=vmem, size = 0x800, scoped, tag = 'scratch operand']
  %s0 = inlined_call_operand.hbm [shape: f32[16,32], index: 0, kind: input, shape index: {}, may-alias: {0,3}]
  %s1 = inlined_call_operand.vmem [shape: bf16[32,32], index: 1, kind: input, shape index: {}]
  %s2 = inlined_call_operand.vmem [shape: f32[1,32], index: 2, kind: input, shape index: {}]
  %s3 = inlined_call_operand.hbm [shape: f32[16,32], index: 3, kind: output, shape index: {}, may-alias: {0,3}]
  %s4 = sld [smem:[#allocation0]]
  $region53: #{tpu_custom_call.1} parent=0
    _
  %s6 = ssub.s32 1, %s4
  %s7 = scalar_select 0, %s6, %s4
  $region1: #{tpu_custom_call.1} parent=0
    #allocation3 [shape = 'u8[8192]{0}', space=vmem, size = 0x2000, scoped, tag = 'input window, operand 0']
    #allocation4 [shape = 's32[2]{0}', space=sflag, size = 0x8, scoped, tag = 'scoped memory for tpu_custom_call.1']
    #allocation5 [shape = 's32[2]{0}', space=sflag, size = 0x8, scoped, tag = 'scoped memory for tpu_custom_call.1']
    #allocation6 [shape = 'u8[8192]{0}', space=vmem, size = 0x2000, scoped, tag = 'output window, operand 0']
    %8 = vsyncpa [#allocation4], 0
    %s9 = scalar_lea.sflag [#allocation4], 1
    %10 = vsyncpa %s9, 0
    %11 = vsyncpa [#allocation5], 0
    %s12 = scalar_lea.sflag [#allocation5], 1
    %13 = vsyncpa %s12, 0
    loop: start=0, step=1, limit=4
    $region2: #{tpu_custom_call.1} parent=1 // loop_pre_header
      _
    $region3: #{tpu_custom_call.1} parent=1 // loop_header
      %s15 = sphi 0, %s19
      %p16 = scmp.ge.s32.totalorder %s15, 4
      %s22 = sphi 0, %s34
      %s23 = sphi 0, %s30
      %s24 = sphi 0, %s22
      %s25 = sphi 0, %s23
      %s26 = sphi 0, %s24
      %s27 = sphi 0, %s25
      %s37 = sphi 0, %s39
      %s40 = sphi 0, %s37
      %s41 = sphi 0, %s40
      %s57 = sphi 0, %s41
      %s63 = sphi 0, %s65
      %s66 = sphi 0, %s63
      %s67 = sphi 0, %s66
      %s83 = sphi 0, %s67
      %s89 = sphi 0, %s91
      %s92 = sphi 0, %s89
      %s93 = sphi 0, %s92
      %s109 = sphi 0, %s93
      %s117 = sphi 0, %s119
      %s120 = sphi 0, %s117
      %s121 = sphi 0, %s120
      %s137 = sphi 0, %s121
    $region4: #{tpu_custom_call.1} parent=1 // loop_header_branch
      %18 = sbr.rel (%p16) target = $region8
    $region5: #{tpu_custom_call.1} parent=1 // loop_body
      %s20 = ssub.s32 %s15, 1
      %s21 = ssub.s32 %s15, 2
      %s28 = sadd.s32 1, %s23
      %p29 = scmp.ge.s32.totalorder %s28, 1
      %s30 = scalar_select %p29, 0, %s28
      %s31 = sadd.s32 1, %s22
      %s32 = scalar_select %p29, %s31, %s22
      %p33 = scmp.ge.s32.totalorder %s32, 2
      %s34 = scalar_select %p33, 0, %s32
      %s35 = ssub.s32 %s22, %s34
      %p36 = scmp.eq.s32.totalorder %s35, 0
      %s38 = sadd.s32 %s37, 1
      %s39 = scalar_select %p36, %s37, %s38
      %p42 = pneg %p36
      %p43 = scmp.eq.s32.totalorder %s15, 1
      %p44 = por %p42, %p43
      %p45 = scmp.ne.s32.totalorder %s37, %s40
      %p46 = scmp.eq.s32.totalorder %s15, 0
      %p47 = por %p45, %p46
      %p48 = scmp.ne.s32.totalorder %s37, %s40
      %p49 = scmp.eq.s32.totalorder %s20, 1
      %p50 = por %p48, %p49
      %p51 = scmp.ne.s32.totalorder %s40, %s41
      %p52 = scmp.eq.s32.totalorder %s20, 0
      %p53 = por %p51, %p52
      %p54 = scmp.ne.s32.totalorder %s40, %s41
      %p55 = scmp.eq.s32.totalorder %s21, 1
      %p56 = por %p54, %p55
      %p58 = scmp.ne.s32.totalorder %s41, %s57
      %p59 = scmp.eq.s32.totalorder %s21, 0
      %p60 = por %p58, %p59
      %s61 = ssub.s32 %s23, %s30
      %p62 = scmp.eq.s32.totalorder %s61, 0
      %s64 = sadd.s32 %s63, 1
      %s65 = scalar_select %p62, %s63, %s64
      %p68 = pneg %p62
      %p69 = scmp.eq.s32.totalorder %s15, 1
      %p70 = por %p68, %p69
      %p71 = scmp.ne.s32.totalorder %s63, %s66
      %p72 = scmp.eq.s32.totalorder %s15, 0
      %p73 = por %p71, %p72
      %p74 = scmp.ne.s32.totalorder %s63, %s66
      %p75 = scmp.eq.s32.totalorder %s20, 1
      %p76 = por %p74, %p75
      %p77 = scmp.ne.s32.totalorder %s66, %s67
      %p78 = scmp.eq.s32.totalorder %s20, 0
      %p79 = por %p77, %p78
      %p80 = scmp.ne.s32.totalorder %s66, %s67
      %p81 = scmp.eq.s32.totalorder %s21, 1
      %p82 = por %p80, %p81
      %p84 = scmp.ne.s32.totalorder %s67, %s83
      %p85 = scmp.eq.s32.totalorder %s21, 0
      %p86 = por %p84, %p85
      %s87 = ssub.s32 %s23, %s30
      %p88 = scmp.eq.s32.totalorder %s87, 0
      %s90 = sadd.s32 %s89, 1
      %s91 = scalar_select %p88, %s89, %s90
      %p94 = pneg %p88
      %p95 = scmp.eq.s32.totalorder %s15, 1
      %p96 = por %p94, %p95
      %p97 = scmp.ne.s32.totalorder %s89, %s92
      %p98 = scmp.eq.s32.totalorder %s15, 0
      %p99 = por %p97, %p98
      %p100 = scmp.ne.s32.totalorder %s89, %s92
      %p101 = scmp.eq.s32.totalorder %s20, 1
      %p102 = por %p100, %p101
      %p103 = scmp.ne.s32.totalorder %s92, %s93
      %p104 = scmp.eq.s32.totalorder %s20, 0
      %p105 = por %p103, %p104
      %p106 = scmp.ne.s32.totalorder %s92, %s93
      %p107 = scmp.eq.s32.totalorder %s21, 1
      %p108 = por %p106, %p107
      %p110 = scmp.ne.s32.totalorder %s93, %s109
      %p111 = scmp.eq.s32.totalorder %s21, 0
      %p112 = por %p110, %p111
      %s113 = ssub.s32 %s22, %s34
      %s114 = ssub.s32 %s23, %s30
      %s115 = sor.u32 %s113, %s114
      %p116 = scmp.eq.s32.totalorder %s115, 0
      %s118 = sadd.s32 %s117, 1
      %s119 = scalar_select %p116, %s117, %s118
      %p122 = pneg %p116
      %p123 = scmp.eq.s32.totalorder %s15, 1
      %p124 = por %p122, %p123
      %p125 = scmp.ne.s32.totalorder %s117, %s120
      %p126 = scmp.eq.s32.totalorder %s15, 0
      %p127 = por %p125, %p126
      %p128 = scmp.ne.s32.totalorder %s117, %s120
      %p129 = scmp.eq.s32.totalorder %s20, 1
      %p130 = por %p128, %p129
      %p131 = scmp.ne.s32.totalorder %s120, %s121
      %p132 = scmp.eq.s32.totalorder %s20, 0
      %p133 = por %p131, %p132
      %p134 = scmp.ne.s32.totalorder %s120, %s121
      %p135 = scmp.eq.s32.totalorder %s21, 1
      %p136 = por %p134, %p135
      %p138 = scmp.ne.s32.totalorder %s121, %s137
      %p139 = scmp.eq.s32.totalorder %s21, 0
      %p140 = por %p138, %p139
      %p141 = scmp.le.s32.totalorder 1, %s15
      %p142 = scmp.lt.s32.totalorder %s15, 3
      %p143 = pnand %p141, %p142
      %p144 = pneg %p143
      // Predicated region
      $region9: #{tpu_custom_call.1} parent=5 // pred_check
        _
      $region10: #{tpu_custom_call.1} parent=5 // pred_check_branch
        %146 = sbr.rel (%p143) target = $region12
      $region11: #{tpu_custom_call.1} parent=5 // pred_region
        %s147 = ssub.s32 %s15, 1
        // Predicated region
        $region13: #{tpu_custom_call.1} parent=11 // pred_check
          %p148 = pneg %p79
        $region14: #{tpu_custom_call.1} parent=11 // pred_check_branch
          %150 = sbr.rel (%p148) target = $region16
        $region15: #{tpu_custom_call.1} parent=11 // pred_region
          %p151 = scmp.lt.s32.totalorder %s25, 0
          %s152 = scalar_select %p151, %s25, 0
          %s153 = smul.addr %s152, 4
          %s154 = scalar_lea.vmem %s1, %s153
        $region16: #{tpu_custom_call.1} parent=11 // pred_fallthru
          _
        // Predicated region
        $region17: #{tpu_custom_call.1} parent=11 // pred_check
          %p155 = pneg %p105
        $region18: #{tpu_custom_call.1} parent=11 // pred_check_branch
          %157 = sbr.rel (%p155) target = $region20
        $region19: #{tpu_custom_call.1} parent=11 // pred_region
          %p158 = scmp.lt.s32.totalorder %s25, 0
          %s159 = scalar_select %p158, %s25, 0
          %s160 = scalar_lea.vmem %s2, %s159
        $region20: #{tpu_custom_call.1} parent=11 // pred_fallthru
          _
      $region12: #{tpu_custom_call.1} parent=5 // pred_fallthru
        _
      %p161 = scmp.lt.s32.totalorder %s15, 2
      // Predicated region
      $region21: #{tpu_custom_call.1} parent=5 // pred_check
        %p162 = pneg %p161
      $region22: #{tpu_custom_call.1} parent=5 // pred_check_branch
        %164 = sbr.rel (%p162) target = $region24
      $region23: #{tpu_custom_call.1} parent=5 // pred_region
        // Predicated region
        $region25: #{tpu_custom_call.1} parent=23 // pred_check
          %p165 = pneg %p47
        $region26: #{tpu_custom_call.1} parent=23 // pred_check_branch
          %167 = sbr.rel (%p165) target = $region28
        $region27: #{tpu_custom_call.1} parent=23 // pred_region
          %s168 = sand.u32 %s37, 1
          %s169 = scalar_lea.sflag [#allocation4], %s168
          %s170 = sand.u32 %s37, 1
          %s171 = smul.addr %s170, 8
          %s172 = scalar_lea.vmem [#allocation3], %s171
          %s174 = ssub.s32 128, 128
          %175 = vsyncadd %s169, %s174
          %s176 = smul.addr %s22, 128
          %s177 = scalar_lea.hbm %s0, %s176
          %s179 = sshll.u32 %s172, 4
          %s180 = int_to_ptr.vmem [resolvable:$true] %s179
          %182 = dma.hbm_to_vmem [thread:$0]  %s177, 128, %s180, %s169
        $region28: #{tpu_custom_call.1} parent=23 // pred_fallthru
          _
      $region24: #{tpu_custom_call.1} parent=5 // pred_fallthru
        _
      %p183 = scmp.le.s32.totalorder 1, %s15
      %p184 = scmp.lt.s32.totalorder %s15, 3
      %p185 = pnand %p183, %p184
      %p186 = pneg %p185
      // Predicated region
      $region29: #{tpu_custom_call.1} parent=5 // pred_check
        _
      $region30: #{tpu_custom_call.1} parent=5 // pred_check_branch
        %188 = sbr.rel (%p185) target = $region32
      $region31: #{tpu_custom_call.1} parent=5 // pred_region
        %s189 = ssub.s32 %s15, 1
        %s190 = sand.u32 %s40, 1
        %s191 = scalar_lea.sflag [#allocation4], %s190
        %s192 = sand.u32 %s40, 1
        %s193 = smul.addr %s192, 8
        %s194 = scalar_lea.vmem [#allocation3], %s193
        // Predicated region
        $region33: #{tpu_custom_call.1} parent=31 // pred_check
          %p195 = pneg %p53
        $region34: #{tpu_custom_call.1} parent=31 // pred_check_branch
          %197 = sbr.rel (%p195) target = $region36
        $region35: #{tpu_custom_call.1} parent=31 // pred_region
          %198 = dma.done %s191, 128
        $region36: #{tpu_custom_call.1} parent=31 // pred_fallthru
          _
        %s199 = sand.u32 %s40, 1
        %s200 = scalar_lea.sflag [#allocation4], %s199
        %s201 = sand.u32 %s40, 1
        %s202 = smul.addr %s201, 8
        %s203 = scalar_lea.vmem [#allocation3], %s202
        %p204 = pneg %p53
        %p205 = pneg %p50
        %p206 = scmp.lt.s32.totalorder %s25, 0
        %s207 = scalar_select %p206, %s25, 0
        %s208 = smul.addr %s207, 4
        %s209 = scalar_lea.vmem %s1, %s208
        %p210 = pneg %p79
        %p211 = pneg %p76
        %p212 = scmp.lt.s32.totalorder %s25, 0
        %s213 = scalar_select %p212, %s25, 0
        %s214 = scalar_lea.vmem %s2, %s213
        %p215 = pneg %p105
        %p216 = pneg %p102
        %p217 = pneg %p133
        %p218 = pneg %p130
        %s219 = sand.u32 %s120, 1
        %s220 = scalar_lea.sflag [#allocation5], %s219
        %s221 = sand.u32 %s120, 1
        %s222 = smul.addr %s221, 8
        %s223 = scalar_lea.vmem [#allocation6], %s222
        %p224 = scmp.lt.s32.totalorder %s25, 0
        %s225 = scalar_select %p224, %s25, 0
        %s226 = smul.addr %s225, 4
        %s227 = scalar_lea.vmem %s1, %s226
        %p228 = scmp.lt.s32.totalorder %s25, 0
        %s229 = scalar_select %p228, %s25, 0
        %s230 = scalar_lea.vmem %s2, %s229
        %p232 = scmp.eq.s32.totalorder %s25, 0
        // Predicated region
        $region37: #{tpu_custom_call.1} parent=31 // pred_check
          %p233 = pneg %p232
        $region38: #{tpu_custom_call.1} parent=31 // pred_check_branch
          %235 = sbr.rel (%p233) target = $region40
        $region39: #{tpu_custom_call.1} parent=31 // pred_region
          %v236 = vld [vmem:[%s194] sm:$0xff]
          %vm237 = vcmask 261120
          %v238 = vsel %vm237, %v236, 0.0
          %239 = vadd.xlane.f32.xlu0 %v238
          %v240 = vpop.xlane.xlu0 %239
          %v241 = vrcp.pop 32.0
          %v242 = vmul.f32 %v240, %v241
          %v243 = vsub.f32 %v236, %v242
          %v244 = vmul.f32 %v243, %v243
          %v245 = vsel %vm237, %v244, 0.0
          %246 = vadd.xlane.f32.xlu0 %v245
          %v247 = vpop.xlane.xlu0 %246
          %v248 = vrcp.pop 31.0
          %v249 = vmul.f32 %v247, %v248
          %v250 = vrsqrt.pop %v249
          %v251 = vmul.f32 %v249, %v250
          %vm252 = vcmp.eq.f32.partialorder %v249, inf
          %v253 = vsel %vm252, %v249, %v251
          %vm254 = vcmp.eq.f32.partialorder %v249, 0.0
          %v255 = vand.u32 %v249, 2147483648
          %v256 = vsel %vm254, %v255, %v253
          %v257 = vadd.f32 %v256, 1e-06
          %v258 = vrcp.pop %v257
          %v259 = vmul.f32 %v243, %v258
          %v260 = vpack.c.bf16 %v259, %v259
          %vm261 = vcmask 257024
          %262 = vst.msk [vmem:[#allocation2] sm:$0xf] %vm261, %v260
        $region40: #{tpu_custom_call.1} parent=31 // pred_fallthru
          _
        %v263 = vld [vmem:[#allocation2] sm:$0xf]
        %v264 = vld [vmem:[%s227] sm:$0xf]
        %v265 = vld [vmem:[%s227 + $0x4] sm:$0xf]
        %v266 = vld [vmem:[%s227 + $0x8] sm:$0xf]
        %v267 = vld [vmem:[%s227 + $0xc] sm:$0xf]
        %v268 = vld [vmem:[%s230] sm:$0x1]
        %v270 = vlaneseq
        %v271 = vshrl.u32 %v270, 7
        %v272 = vsub.s32 0, %v271
        %v273 = vrot.slane %v268, %v272
        %v279 = vunpack.c.l.b16 %v264
        %v280 = vunpack.c.l.b16 %v265
        %v281 = vunpack.c.l.b16 %v266
        %v282 = vunpack.c.l.b16 %v267
        %v283 = vpack.c.b16 %v280, %v279
        %v284 = vpack.c.b16 %v282, %v281
        %vm287 = vcmask 261120
        %v289 = vsel %vm287, %v263, 0
        %291 = vmatprep.subr.bf16.mxu0 0
        %292 = vmatpush1.bf16.msra.mxu0 %v283
        %293 = vmatprep.subr.bf16.mxu0 0
        %294 = vmatpush1.bf16.msra.mxu0 %v284
        %295 = vmatprep.subr.bf16.mxu0 0
        %296 = vmatpush1.bf16.msra.mxu0 0
        %297 = vmatprep.subr.bf16.mxu0 0
        %298 = vmatpush1.bf16.msra.mxu0 0
        %299 = vmatprep.subr.bf16.mxu0 0
        %300 = vmatpush1.bf16.msra.mxu0 0
        %301 = vmatprep.subr.bf16.mxu0 0
        %302 = vmatpush1.bf16.msra.mxu0 0
        %303 = vmatprep.subr.bf16.mxu0 0
        %304 = vmatpush1.bf16.msra.mxu0 0
        %305 = vmatprep.subr.bf16.mxu0 0
        %306 = vmatpush1.bf16.msra.mxu0 0
        %307 = vmatprep.subr.bf16.mxu0 0
        %308 = vmatpush1.bf16.msra.mxu0 0
        %309 = vmatprep.subr.bf16.mxu0 0
        %310 = vmatpush1.bf16.msra.mxu0 0
        %311 = vmatprep.subr.bf16.mxu0 0
        %312 = vmatpush1.bf16.msra.mxu0 0
        %313 = vmatprep.subr.bf16.mxu0 0
        %314 = vmatpush1.bf16.msra.mxu0 0
        %315 = vmatprep.subr.bf16.mxu0 0
        %316 = vmatpush1.bf16.msra.mxu0 0
        %317 = vmatprep.subr.bf16.mxu0 0
        %318 = vmatpush1.bf16.msra.mxu0 0
        %319 = vmatprep.subr.bf16.mxu0 0
        %320 = vmatpush1.bf16.msra.mxu0 0
        %321 = vmatprep.subr.bf16.mxu0 0
        %322 = vmatpush1.bf16.msra.mxu0 0
        %323 = vmatprep.mubr.bf16.mxu0 0
        %324 = vmatmul.mubr.bf16.gmra.mrb[0].mxu0 %v289
        %v325 = vpop.f32.mrb[0].mxu0
        %v326 = vadd.f32 %v273, %v325
        %v327 = vpop.f32.mrb[0].mxu0
        %v328 = vpop.f32.mrb[0].mxu0
        %v329 = vpop.f32.mrb[0].mxu0
        %330 = vdwg.mxu0
        %v331 = vld [vmem:[%s194] sm:$0xff]
        %v332 = vadd.f32 %v331, %v326
        %333 = vst.msk [vmem:[%s223] sm:$0xff] %vm287, %v332
        %s334 = sand.u32 %s120, 1
        %s335 = scalar_lea.sflag [#allocation5], %s334
        %s336 = sand.u32 %s120, 1
        %s337 = smul.addr %s336, 8
        %s338 = scalar_lea.vmem [#allocation6], %s337
        // Predicated region
        $region41: #{tpu_custom_call.1} parent=31 // pred_check
          %p339 = pneg %p130
        $region42: #{tpu_custom_call.1} parent=31 // pred_check_branch
          %341 = sbr.rel (%p339) target = $region44
        $region43: #{tpu_custom_call.1} parent=31 // pred_region
          %s343 = ssub.s32 128, 128
          %344 = vsyncadd %s335, %s343
          %s345 = sadd.s32 %s25, %s24
          %s346 = smul.addr %s345, 128
          %s347 = scalar_lea.hbm %s3, %s346
          %s349 = sshll.u32 %s338, 4
          %s350 = int_to_ptr.vmem [resolvable:$true] %s349
          %352 = dma.vmem_to_hbm [thread:$0]  %s350, 128, %s347, %s335
        $region44: #{tpu_custom_call.1} parent=31 // pred_fallthru
          _
      $region32: #{tpu_custom_call.1} parent=5 // pred_fallthru
        _
      %p353 = scmp.le.s32.totalorder 2, %s15
      // Predicated region
      $region45: #{tpu_custom_call.1} parent=5 // pred_check
        %p354 = pneg %p353
      $region46: #{tpu_custom_call.1} parent=5 // pred_check_branch
        %356 = sbr.rel (%p354) target = $region48
      $region47: #{tpu_custom_call.1} parent=5 // pred_region
        %s357 = ssub.s32 %s15, 2
        // Predicated region
        $region49: #{tpu_custom_call.1} parent=47 // pred_check
          %p358 = pneg %p136
        $region50: #{tpu_custom_call.1} parent=47 // pred_check_branch
          %360 = sbr.rel (%p358) target = $region52
        $region51: #{tpu_custom_call.1} parent=47 // pred_region
          %s361 = sand.u32 %s121, 1
          %s362 = scalar_lea.sflag [#allocation5], %s361
          %s363 = sand.u32 %s121, 1
          %s364 = smul.addr %s363, 8
          %s365 = scalar_lea.vmem [#allocation6], %s364
          %366 = dma.done %s362, 128
        $region52: #{tpu_custom_call.1} parent=47 // pred_fallthru
          _
      $region48: #{tpu_custom_call.1} parent=5 // pred_fallthru
        _
    $region6: #{tpu_custom_call.1} parent=1 // loop_footer
      %s19 = sadd.s32 1, %s15
    $region7: #{tpu_custom_call.1} parent=1 // loop_footer_branch
      %14 = sbr.rel target = $region3
    $region8: #{tpu_custom_call.1} parent=1 // loop_exit
      _
    %367 = vsyncpa [#allocation4], 1
    %s368 = scalar_lea.sflag [#allocation4], 1
    %369 = vsyncpa %s368, 1
    %370 = vsyncpa [#allocation5], 1
    %s371 = scalar_lea.sflag [#allocation5], 1
    %372 = vsyncpa %s371, 1

</llo_original>
